<compile_context>
chip_gen: v7x
topology: tpu7x:2x2x1
jax: 0.10.0
libtpu: 0.0.40
codegen_flags: <defaults>
</compile_context>

<pallas_src>
import math

import jax
import jax.numpy as jnp
from jax.experimental import pallas as pl
from jax.experimental.pallas import tpu as pltpu


# ----------------------------------------------------------------------------
# Kernel body: plain lane-dense elementwise add; (1, TC) pe broadcasts over
# the sublane (row) axis of the (TB, TC) x tile.
# ----------------------------------------------------------------------------
def _pe_add_kernel(x_ref, pe_ref, o_ref):
    o_ref[...] = x_ref[...] + pe_ref[...]


# ----------------------------------------------------------------------------
# pe construction — exactly mirrors the PyTorch __init__ (d_model is doubled).
# ----------------------------------------------------------------------------
def make_positional_encoding(d_model: int, seq_len: int):
    d = 2 * d_model
    position = jnp.arange(0, seq_len, dtype=jnp.float32)[:, None]             # (S, 1)
    div_term = jnp.exp(
        jnp.arange(0, d, 2, dtype=jnp.float32) * (-math.log(10000.0) / d)     # (D/2,)
    )
    pe = jnp.zeros((seq_len, d), dtype=jnp.float32)
    pe = pe.at[:, 0::2].set(jnp.sin(position * div_term))
    pe = pe.at[:, 1::2].set(jnp.cos(position * div_term))
    return pe                                                                  # (S, D)


def prepare_pe_flat(pe: jax.Array, S: int, dtype) -> jax.Array:
    """Hoisted, cacheable per (S, dtype): slice + cast + lane-dense flatten to (1, S*D)."""
    D = pe.shape[1]
    return pe[:S, :].astype(dtype).reshape(1, S * D)


# ----------------------------------------------------------------------------
# Hardware / tiling helpers.
# ----------------------------------------------------------------------------
def _round_down(x: int, m: int) -> int:
    return (x // m) * m


def _vmem_capacity_bytes() -> int:
    try:
        return int(pltpu.get_tpu_info().vmem_capacity_bytes)
    except Exception:
        return 64 << 20   # conservative (v7x-class per-TC VMEM)


def _vmem_need_bytes(TB: int, TC: int, itemsize: int, sub: int) -> int:
    """Double-buffered x + out tiles plus double-buffered pe slice, including
    physical sublane padding (a (1, TC) block occupies `sub` sublanes)."""
    tb_pad = max(sub, pl.cdiv(TB, sub) * sub)
    return (4 * tb_pad * TC + 2 * sub * TC) * itemsize


def _pick_tiles(B: int, C: int, itemsize: int, block_bytes: int, vmem_budget: int):
    """Choose (TB, TC) so tiles are big (~block_bytes), layout-legal (lane dim a
    multiple of 128 or == C; sublane dim a multiple of the dtype quantum or == B)
    and the double-buffered working set fits `vmem_budget`. Ragged edge blocks
    are handled by a cdiv grid (Pallas masks them for elementwise kernels)."""
    sub = max(8, 32 // itemsize)   # sublane quantum: 8 f32, 16 bf16, 32 int8

    # Column (lane) tile.
    if C * itemsize <= block_bytes or C <= 128:
        TC = C
    else:
        max_cols = max(128, _round_down(block_bytes // itemsize, 128))
        TC = min(max_cols, pl.cdiv(C, 128) * 128)

    # Row (sublane) tile.
    max_rows = max(1, block_bytes // (TC * itemsize))
    if B <= max_rows:
        TB = B
    else:
        TB = max(sub, _round_down(max_rows, sub))

    # Shrink until the (padded, double-buffered) working set fits the budget.
    while _vmem_need_bytes(TB, TC, itemsize, sub) > vmem_budget:
        if TC > 128:
            new_tc = max(128, _round_down(TC // 2, 128))
            if new_tc < TC:
                TC = new_tc
                continue
        if TB > sub:
            new_tb = max(sub, _round_down(TB // 2, sub))
            if new_tb < TB:
                TB = new_tb
                continue
        break   # already at the minimum legal tile

    return TB, TC, sub


# ----------------------------------------------------------------------------
# Forward.
# ----------------------------------------------------------------------------
def positional_encoding_forward(
    x: jax.Array,
    pe: jax.Array,
    *,
    pe_flat: jax.Array | None = None,
    block_bytes: int | None = None,
    donate_x: bool = False,
    min_kernel_bytes: int = 1 << 20,
    force_kernel: bool = False,
) -> jax.Array:
    """x: (B, S, D); pe: (seq_len, D) f32 (or pass a cached pe_flat of shape
    (1, S*D) in x.dtype).  Returns x + pe[:S] (eval-mode dropout = identity)."""
    B, S, D = x.shape
    C = S * D
    itemsize = jnp.dtype(x.dtype).itemsize
    total_bytes = B * C * itemsize

    if pe_flat is None:
        pe_flat = prepare_pe_flat(pe, S, x.dtype)   # prefer caching this at init

    # Tiny inputs: a fused XLA add beats any kernel launch.
    if total_bytes < min_kernel_bytes and not force_kernel:
        return (x.reshape(B, C) + pe_flat).reshape(B, S, D)

    # Generation-aware tile / limit choices.
    vmem_cap = _vmem_capacity_bytes()
    if vmem_cap <= (64 << 20):        # v7x-class: 64 MiB VMEM per TensorCore
        limit_cap = 44 << 20
        if block_bytes is None:
            block_bytes = 4 << 20
    else:                             # v5e / v6e: 128 MiB VMEM
        limit_cap = 64 << 20
        if block_bytes is None:
            block_bytes = 8 << 20

    x_flat = x.reshape(B, C)

    TB, TC, sub = _pick_tiles(B, C, itemsize, block_bytes, limit_cap - (8 << 20))

    # Guarantee >=2 grid steps for non-trivial inputs so a 2-TC chip (v7x) can
    # shard the parallel axes across both TensorCores (cheap on 1-TC chips).
    n_rows = pl.cdiv(B, TB)
    n_cols = pl.cdiv(C, TC)
    if n_rows * n_cols == 1 and total_bytes > (4 << 20):
        if C >= 256:
            TC = max(128, _round_down(pl.cdiv(C, 2), 128))
        elif B >= 2 * sub:
            TB = max(sub, _round_down(pl.cdiv(B, 2), sub))
        n_rows = pl.cdiv(B, TB)
        n_cols = pl.cdiv(C, TC)

    vmem_need = _vmem_need_bytes(TB, TC, itemsize, sub)
    vmem_limit = min(max(vmem_need + (8 << 20), 16 << 20), limit_cap)

    # Grid order (cols, rows): the pe block index depends only on the slow axis,
    # so Pallas fetches each pe slice once and reuses it across all row tiles.
    out_flat = pl.pallas_call(
        _pe_add_kernel,
        out_shape=jax.ShapeDtypeStruct((B, C), x.dtype),
        grid_spec=pltpu.PrefetchScalarGridSpec(
            num_scalar_prefetch=0,
            grid=(n_cols, n_rows),
            in_specs=[
                pl.BlockSpec((TB, TC), lambda j, i: (i, j)),   # x tile
                pl.BlockSpec((1, TC), lambda j, i: (0, j)),    # pe slice (constant over rows)
            ],
            out_specs=pl.BlockSpec((TB, TC), lambda j, i: (i, j)),
        ),
        compiler_params=pltpu.CompilerParams(
            dimension_semantics=("parallel", "parallel"),
            vmem_limit_bytes=vmem_limit,
        ),
        input_output_aliases=({0: 0} if donate_x else {}),
    )(x_flat, pe_flat)

    return out_flat.reshape(B, S, D)


# ----------------------------------------------------------------------------
# Demo / correctness check (small shapes; kernel path forced).
# ----------------------------------------------------------------------------
if __name__ == "__main__":
    # Module hyper-params (small, consistent with the forward):
    d_model = 16           # internal feature dim becomes 2*d_model = 32
    seq_len = 8
    dropout = 0.1          # eval-mode => identity
    batch = 2

    D = 2 * d_model
    key = jax.random.PRNGKey(0)
    x = jax.random.normal(key, (batch, seq_len, D), dtype=jnp.float32)

    pe = make_positional_encoding(d_model, seq_len)

    # f32 run + reference check (pe_flat hoisted/cached, as a real caller would).
    pe_flat_f32 = prepare_pe_flat(pe, seq_len, jnp.float32)
    out = positional_encoding_forward(x, pe, pe_flat=pe_flat_f32, force_kernel=True)
    out = jax.block_until_ready(out)
    ref = x + pe[None, :seq_len, :]
    assert out.shape == x.shape and out.dtype == x.dtype
    assert jnp.allclose(out, ref, atol=1e-6), "f32 mismatch vs reference"

    # bf16 run (halved HBM traffic path) + relaxed check.
    x_bf16 = x.astype(jnp.bfloat16)
    pe_flat_bf16 = prepare_pe_flat(pe, seq_len, jnp.bfloat16)
    out_bf16 = jax.block_until_ready(
        positional_encoding_forward(x_bf16, pe, pe_flat=pe_flat_bf16, force_kernel=True)
    )
    ref_bf16 = x_bf16 + pe.astype(jnp.bfloat16)[None, :seq_len, :]
    assert out_bf16.dtype == jnp.bfloat16
    assert jnp.allclose(out_bf16.astype(jnp.float32),
                        ref_bf16.astype(jnp.float32), atol=1e-2), "bf16 mismatch"

    print("KERNEL_OK")
</pallas_src>

<mosaic_0001>
module attributes {stable_mosaic.version = 11 : i64} {
  func.func @_pe_add_kernel(%arg0: i32, %arg1: i32, %arg2: memref<2x256xf32, #tpu.memory_space<vmem>>, %arg3: memref<1x256xf32, #tpu.memory_space<vmem>>, %arg4: memref<2x256xf32, #tpu.memory_space<vmem>>) attributes {dimension_semantics = [#tpu.dimension_semantics<parallel>, #tpu.dimension_semantics<parallel>], iteration_bounds = array<i64: 1, 1>, scalar_prefetch = 0 : i64, scratch_operands = 0 : i64, tpu.core_type = #tpu.core_type<tc>, window_params = [{transform_indices = @transform_0, window_bounds = array<i64: 2, 256>}, {transform_indices = @transform_1, window_bounds = array<i64: 1, 256>}, {transform_indices = @transform_2, window_bounds = array<i64: 2, 256>}]} {
    %c0 = arith.constant 0 : index
    %c0_0 = arith.constant 0 : index
    %0 = vector.load %arg2[%c0, %c0_0] : memref<2x256xf32, #tpu.memory_space<vmem>>, vector<2x256xf32>
    %c0_1 = arith.constant 0 : index
    %c0_2 = arith.constant 0 : index
    %1 = vector.load %arg3[%c0_1, %c0_2] : memref<1x256xf32, #tpu.memory_space<vmem>>, vector<1x256xf32>
    %2 = vector.broadcast %1 : vector<1x256xf32> to vector<2x256xf32>
    %3 = arith.addf %0, %2 : vector<2x256xf32>
    %c0_3 = arith.constant 0 : index
    %c0_4 = arith.constant 0 : index
    %4 = vector.load %arg4[%c0_3, %c0_4] : memref<2x256xf32, #tpu.memory_space<vmem>>, vector<2x256xf32>
    tpu.vector_store %arg4[%c0_3, %c0_4], %3 {strides = array<i32>} : memref<2x256xf32, #tpu.memory_space<vmem>>, vector<2x256xf32>,
    return
  }
  func.func @transform_0(%arg0: i32, %arg1: i32) -> (i32, i32) {
    %c0_i32 = arith.constant 0 : i32
    return %arg1, %arg0 : i32, i32
  }
  func.func @transform_1(%arg0: i32, %arg1: i32) -> (i32, i32) {
    %c0_i32 = arith.constant 0 : i32
    %c0_i32_0 = arith.constant 0 : i32
    return %c0_i32, %arg0 : i32, i32
  }
  func.func @transform_2(%arg0: i32, %arg1: i32) -> (i32, i32) {
    %c0_i32 = arith.constant 0 : i32
    return %arg1, %arg0 : i32, i32
  }
}

</mosaic_0001>

<llo_original>
// kernel: tpu_custom_call.1
$region0: #{tpu_custom_call.1}
  #allocation0 [shape = 'u32[]', space=smem, size = 0x4, offset = 0x4, fixed_abs, tag = 'smem constant byte address 0x4 - core index']
  #allocation1 [shape = 'u32[144,128]{1,0:T(1,128)}', space=vmem, size = 0x12000, scoped, tag = 'internal scratch']
  %s0 = inlined_call_operand.hbm [shape: f32[2,256], index: 0, kind: input, shape index: {}]
  %s1 = inlined_call_operand.vmem [shape: f32[1,256], index: 1, kind: input, shape index: {}]
  %s2 = inlined_call_operand.hbm [shape: f32[2,256], index: 2, kind: output, shape index: {}]
  %s3 = sld [smem:[#allocation0]]
  $region22: #{tpu_custom_call.1} parent=0
    _
  %s5 = ssub.s32 1, %s3
  %s6 = scalar_select 0, %s5, %s3
  $region1: #{tpu_custom_call.1} parent=0
    #allocation2 [shape = 'u8[2048]{0}', space=vmem, size = 0x800, scoped, tag = 'input window, operand 0, single buffered']
    #allocation3 [shape = 's32[1]{0}', space=sflag, size = 0x4, scoped, tag = 'scoped memory for tpu_custom_call.1']
    #allocation4 [shape = 's32[1]{0}', space=sflag, size = 0x4, scoped, tag = 'scoped memory for tpu_custom_call.1']
    #allocation5 [shape = 'u8[2048]{0}', space=vmem, size = 0x800, scoped, tag = 'output window, operand 0, single buffered']
    %7 = vsyncpa [#allocation3], 0
    %8 = vsyncpa [#allocation4], 0
    // Predicated region
    $region2: #{tpu_custom_call.1} parent=1 // pred_check
      _
    $region3: #{tpu_custom_call.1} parent=1 // pred_check_branch
      %10 = sbr.rel (0) target = $region5
    $region4: #{tpu_custom_call.1} parent=1 // pred_region
      %s12 = ssub.s32 64, 64
      %13 = vsyncadd [#allocation3], %s12
      %s15 = sshll.u32 [#allocation2], 4
      %s16 = int_to_ptr.vmem [resolvable:$true] %s15
      %18 = dma.hbm_to_vmem [thread:$0]  %s0, 64, %s16, [#allocation3]
    $region5: #{tpu_custom_call.1} parent=1 // pred_fallthru
      _
    // Predicated region
    $region6: #{tpu_custom_call.1} parent=1 // pred_check
      _
    $region7: #{tpu_custom_call.1} parent=1 // pred_check_branch
      %20 = sbr.rel (0) target = $region9
    $region8: #{tpu_custom_call.1} parent=1 // pred_region
      _
    $region9: #{tpu_custom_call.1} parent=1 // pred_fallthru
      _
    // Predicated region
    $region10: #{tpu_custom_call.1} parent=1 // pred_check
      _
    $region11: #{tpu_custom_call.1} parent=1 // pred_check_branch
      %22 = sbr.rel (0) target = $region13
    $region12: #{tpu_custom_call.1} parent=1 // pred_region
      %23 = dma.done [#allocation3], 64
    $region13: #{tpu_custom_call.1} parent=1 // pred_fallthru
      _
    %v24 = vld [vmem:[#allocation2] sm:$0xf]
    %v25 = vld [vmem:[%s1] sm:$0x3]
    %v27 = vlaneseq
    %v28 = vshrl.u32 %v27, 7
    %v29 = vsub.s32 0, %v28
    %v30 = vrot.slane %v25, %v29
    %v31 = vlaneseq
    %v32 = vshrl.u32 %v31, 7
    %v33 = vsub.s32 1, %v32
    %v34 = vrot.slane %v25, %v33
    %v35 = vcombine.low %v30, %v34
    %v37 = vunpack.c.l.s4 1983009808
    %v38 = vunpack.c.0.s8 %v37
    %v39 = vlaneseq
    %v40 = vshrl.u32 %v39, 7
    %v41 = vsub.s32 %v38, %v40
    %v42 = vrot.slane %v35, %v41
    %v44 = vadd.f32 %v24, %v42
    %45 = vst [vmem:[#allocation5] sm:$0xf] %v44
    // Predicated region
    $region14: #{tpu_custom_call.1} parent=1 // pred_check
      _
    $region15: #{tpu_custom_call.1} parent=1 // pred_check_branch
      %47 = sbr.rel (0) target = $region17
    $region16: #{tpu_custom_call.1} parent=1 // pred_region
      %s49 = ssub.s32 64, 64
      %50 = vsyncadd [#allocation4], %s49
      %s52 = sshll.u32 [#allocation5], 4
      %s53 = int_to_ptr.vmem [resolvable:$true] %s52
      %55 = dma.vmem_to_hbm [thread:$0]  %s53, 64, %s2, [#allocation4]
    $region17: #{tpu_custom_call.1} parent=1 // pred_fallthru
      _
    // Predicated region
    $region18: #{tpu_custom_call.1} parent=1 // pred_check
      _
    $region19: #{tpu_custom_call.1} parent=1 // pred_check_branch
      %57 = sbr.rel (0) target = $region21
    $region20: #{tpu_custom_call.1} parent=1 // pred_region
      %58 = dma.done [#allocation4], 64
    $region21: #{tpu_custom_call.1} parent=1 // pred_fallthru
      _
    %59 = vsyncpa [#allocation3], 1
    %60 = vsyncpa [#allocation4], 1

</llo_original>
